<compile_context>
chip_gen: v7x
topology: tpu7x:2x2x1
jax: 0.10.0
libtpu: 0.0.40
codegen_flags: <defaults>
</compile_context>

<pallas_src>
import jax
import jax.numpy as jnp
from jax.experimental import pallas as pl
from jax.experimental.pallas import tpu as pltpu


def _embed_kernel(p_ref, w_ref, pos_ref, o_ref):
    # p_ref:   (1, TN, Kp)  bf16 patches tile for one image
    # w_ref:   (Kp, D)      bf16 weight; constant block index -> DMA'd once
    # pos_ref: (TN, D)      f32 pos embedding with conv bias pre-folded in;
    #                       constant across the inner (batch) grid axis, so it
    #                       is only re-fetched when the N-tile index changes.
    # o_ref:   (1, TN, D)
    acc = jnp.dot(p_ref[0], w_ref[...], preferred_element_type=jnp.float32)
    o_ref[0] = (acc + pos_ref[...]).astype(o_ref.dtype)


def _round_up(x, m):
    return (x + m - 1) // m * m


def _choose_tiling_n(n, batch, target=512):
    """Return (TN, Np): sublane-aligned N-tile and padded N (multiple of TN).

    Tiles are near `target` rows with minimal padding.  For batch==1 the patch
    axis is split into at least 2 tiles so the v7x dual-TensorCore 'parallel'
    sharding has work; on single-TC parts the extra tile costs one ~0.35us
    grid step, which is negligible.
    """
    n8 = _round_up(n, 8)
    k = max(1, -(-n8 // target))           # ceil(n8 / target)
    if batch == 1 and k == 1 and n8 >= 16:
        k = 2
    tn = _round_up(-(-n8 // k), 8)          # ceil(n8 / k), sublane aligned
    return tn, k * tn


def prepare_patch_embedding_params(conv_weight, conv_bias, pos_embedding,
                                   compute_dtype=jnp.bfloat16):
    """One-time (model-load) parameter prep.

    conv_weight (D, C, P, P) -> (Kp, D) bf16 matmul RHS (K zero-padded to a
    multiple of 128); conv_bias is folded into the f32 position-embedding
    table (one fewer kernel input, added once per output row).
    """
    D = conv_weight.shape[0]
    K = conv_weight.shape[1] * conv_weight.shape[2] * conv_weight.shape[3]
    Kp = _round_up(K, 128)
    w_kd = conv_weight.reshape(D, K).T                       # (K, D)
    w_kd = jnp.pad(w_kd, ((0, Kp - K), (0, 0))).astype(compute_dtype)
    pos_plus_bias = (pos_embedding.astype(jnp.float32)
                     + conv_bias.astype(jnp.float32)[None, :])
    return w_kd, pos_plus_bias


def siglip_vision_embeddings(pixel_values, w_kd, pos_plus_bias, patch_size,
                             *, tile_n_target=512,
                             compute_dtype=jnp.bfloat16,
                             out_dtype=jnp.bfloat16):
    """
    pixel_values:  (B, C, H, W) float32
    w_kd:          (Kp, D)      prepared weight (see prepare_patch_embedding_params)
    pos_plus_bias: (N, D)       position embedding + conv bias, f32
    returns:       (B, N, D)    in out_dtype (default bf16)
    """
    # TODO(synk): interpolate_pos_encoding=True path (bicubic resize of the
    # position table) is not implemented; default forward path only.
    B, C, H, W = pixel_values.shape
    P = patch_size
    gh, gw = H // P, W // P
    N = gh * gw
    K = C * P * P
    Kp, D = w_kd.shape

    # Patchify: (B,C,H,W) -> (B, N, K), K ordered (c, kh, kw).
    patches = pixel_values.reshape(B, C, gh, P, gw, P)
    patches = patches.transpose(0, 2, 4, 1, 3, 5).reshape(B, N, K)
    patches = patches.astype(compute_dtype)

    TN, Np = _choose_tiling_n(N, B, tile_n_target)
    pad_n = Np - N
    patches = jnp.pad(patches, ((0, 0), (0, pad_n), (0, Kp - K)))
    pos = pos_plus_bias
    if pad_n:
        pos = jnp.pad(pos, ((0, pad_n), (0, 0)))

    grid = (Np // TN, B)   # batch innermost -> pos tile DMA'd once per N-tile

    out_itemsize = jnp.dtype(out_dtype).itemsize
    cost = pl.CostEstimate(
        flops=2 * B * Np * Kp * D,
        transcendentals=0,
        bytes_accessed=(patches.size * patches.dtype.itemsize
                        + w_kd.size * w_kd.dtype.itemsize
                        + pos.size * pos.dtype.itemsize
                        + B * Np * D * out_itemsize),
    )

    out = pl.pallas_call(
        _embed_kernel,
        out_shape=jax.ShapeDtypeStruct((B, Np, D), out_dtype),
        grid_spec=pltpu.PrefetchScalarGridSpec(
            num_scalar_prefetch=0,
            grid=grid,
            in_specs=[
                pl.BlockSpec((1, TN, Kp), lambda t, b: (b, t, 0)),
                pl.BlockSpec((Kp, D), lambda t, b: (0, 0)),
                pl.BlockSpec((TN, D), lambda t, b: (t, 0)),
            ],
            out_specs=pl.BlockSpec((1, TN, D), lambda t, b: (b, t, 0)),
        ),
        compiler_params=pltpu.CompilerParams(
            dimension_semantics=("parallel", "parallel"),
            vmem_limit_bytes=32 * 1024 * 1024,
            allow_input_fusion=[True, False, False],
        ),
        cost_estimate=cost,
    )(patches, w_kd, pos)

    if pad_n:
        out = out[:, :N, :]
    return out


def reference(pixel_values, conv_weight, conv_bias, pos_embedding, patch_size):
    # pure-JAX reference using lax conv (NCHW, OIHW) for validation
    y = jax.lax.conv_general_dilated(
        pixel_values, conv_weight,
        window_strides=(patch_size, patch_size),
        padding="VALID",
        dimension_numbers=("NCHW", "OIHW", "NCHW"),
    ) + conv_bias[None, :, None, None]
    B, D, gh, gw = y.shape
    y = y.reshape(B, D, gh * gw).transpose(0, 2, 1)          # (B, N, D)
    return y + pos_embedding[None]


if __name__ == "__main__":
    def run_case(key, B, C, H, W, P, D):
        N = (H // P) * (W // P)
        k1, k2, k3, k4 = jax.random.split(key, 4)
        pixel_values = jax.random.normal(k1, (B, C, H, W), dtype=jnp.float32)
        conv_weight = jax.random.normal(k2, (D, C, P, P), dtype=jnp.float32) * 0.02
        conv_bias = jax.random.normal(k3, (D,), dtype=jnp.float32) * 0.02
        pos_embedding = jax.random.normal(k4, (N, D), dtype=jnp.float32) * 0.02

        w_kd, pos_plus_bias = prepare_patch_embedding_params(
            conv_weight, conv_bias, pos_embedding)
        out = jax.block_until_ready(
            siglip_vision_embeddings(pixel_values, w_kd, pos_plus_bias, P))
        ref = reference(pixel_values, conv_weight, conv_bias, pos_embedding, P)
        assert out.shape == (B, N, D), (out.shape, (B, N, D))
        # bf16 operands + bf16 output vs. full-f32 conv reference.
        err = float(jnp.max(jnp.abs(out.astype(jnp.float32) - ref)))
        assert err < 2e-2, err

    key = jax.random.PRNGKey(0)
    ka, kb = jax.random.split(key)
    # Small config (single N-tile per image): B=2, C=3, 16x16 image, P=4, D=32.
    run_case(ka, B=2, C=3, H=16, W=16, P=4, D=32)
    # Padded/tiled path: N=196 (no 8-multiple divisor) -> padded to 2 tiles of
    # 104 for the B==1 dual-TC split; D=128 exercises a full lane width.
    run_case(kb, B=1, C=3, H=56, W=56, P=4, D=128)

    print("KERNEL_OK")
</pallas_src>

<mosaic_0001>
module attributes {stable_mosaic.version = 11 : i64} {
  func.func @_embed_kernel(%arg0: i32, %arg1: i32, %arg2: memref<1x16x128xbf16, #tpu.memory_space<vmem>>, %arg3: memref<128x32xbf16, #tpu.memory_space<vmem>>, %arg4: memref<16x32xf32, #tpu.memory_space<vmem>>, %arg5: memref<1x16x32xbf16, #tpu.memory_space<vmem>>) attributes {dimension_semantics = [#tpu.dimension_semantics<parallel>, #tpu.dimension_semantics<parallel>], iteration_bounds = array<i64: 1, 2>, scalar_prefetch = 0 : i64, scratch_operands = 0 : i64, tpu.core_type = #tpu.core_type<tc>, window_params = [{transform_indices = @transform_0, window_bounds = array<i64: 1, 16, 128>}, {pipeline_mode = #tpu.pipeline_mode<synchronous>, transform_indices = @transform_1, window_bounds = array<i64: 128, 32>}, {transform_indices = @transform_2, window_bounds = array<i64: 16, 32>}, {transform_indices = @transform_3, window_bounds = array<i64: 1, 16, 32>}]} {
    %c0 = arith.constant 0 : index
    %c0_0 = arith.constant 0 : index
    %c0_1 = arith.constant 0 : index
    %0 = vector.load %arg2[%c0, %c0_0, %c0_1] : memref<1x16x128xbf16, #tpu.memory_space<vmem>>, vector<1x16x128xbf16>
    %1 = vector.shape_cast %0 : vector<1x16x128xbf16> to vector<16x128xbf16>
    %c0_2 = arith.constant 0 : index
    %c0_3 = arith.constant 0 : index
    %2 = vector.load %arg3[%c0_2, %c0_3] : memref<128x32xbf16, #tpu.memory_space<vmem>>, vector<128x32xbf16>
    %cst = arith.constant dense<0.000000e+00> : vector<16x32xf32>
    %3 = tpu.matmul %1, %2, %cst {dimension_numbers = #tpu.dot_dimension_numbers<[1], [0], [0], [1], [0, 0, 1, 1], [], []>} : vector<16x128xbf16>, vector<128x32xbf16>, vector<16x32xf32> -> vector<16x32xf32>
    %c0_4 = arith.constant 0 : index
    %c0_5 = arith.constant 0 : index
    %4 = vector.load %arg4[%c0_4, %c0_5] : memref<16x32xf32, #tpu.memory_space<vmem>>, vector<16x32xf32>
    %5 = arith.addf %3, %4 : vector<16x32xf32>
    %6 = arith.truncf %5 : vector<16x32xf32> to vector<16x32xbf16>
    %c0_6 = arith.constant 0 : index
    %c0_7 = arith.constant 0 : index
    %c0_8 = arith.constant 0 : index
    %7 = vector.load %arg5[%c0_6, %c0_7, %c0_8] : memref<1x16x32xbf16, #tpu.memory_space<vmem>>, vector<1x16x32xbf16>
    %8 = vector.shape_cast %7 : vector<1x16x32xbf16> to vector<16x32xbf16>
    %9 = vector.shape_cast %6 : vector<16x32xbf16> to vector<1x16x32xbf16>
    tpu.vector_store %arg5[%c0_6, %c0_7, %c0_8], %9 {strides = array<i32>} : memref<1x16x32xbf16, #tpu.memory_space<vmem>>, vector<1x16x32xbf16>,
    return
  }
  func.func @transform_0(%arg0: i32, %arg1: i32) -> (i32, i32, i32) {
    %c0_i32 = arith.constant 0 : i32
    %c0_i32_0 = arith.constant 0 : i32
    return %arg1, %arg0, %c0_i32 : i32, i32, i32
  }
  func.func @transform_1(%arg0: i32, %arg1: i32) -> (i32, i32) {
    %c0_i32 = arith.constant 0 : i32
    %c0_i32_0 = arith.constant 0 : i32
    %c0_i32_1 = arith.constant 0 : i32
    return %c0_i32, %c0_i32_0 : i32, i32
  }
  func.func @transform_2(%arg0: i32, %arg1: i32) -> (i32, i32) {
    %c0_i32 = arith.constant 0 : i32
    %c0_i32_0 = arith.constant 0 : i32
    return %arg0, %c0_i32 : i32, i32
  }
  func.func @transform_3(%arg0: i32, %arg1: i32) -> (i32, i32, i32) {
    %c0_i32 = arith.constant 0 : i32
    %c0_i32_0 = arith.constant 0 : i32
    return %arg1, %arg0, %c0_i32 : i32, i32, i32
  }
}

</mosaic_0001>

<llo_original>
// kernel: tpu_custom_call.1
$region0: #{tpu_custom_call.1}
  #allocation0 [shape = 'u32[]', space=smem, size = 0x4, offset = 0x4, fixed_abs, tag = 'smem constant byte address 0x4 - core index']
  #allocation1 [shape = 'u32[144,128]{1,0:T(1,128)}', space=vmem, size = 0x12000, scoped, tag = 'internal scratch']
  %s0 = inlined_call_operand.vmem [shape: bf16[2,16,128], index: 0, kind: input, shape index: {}]
  %s1 = inlined_call_operand.vmem [shape: bf16[128,32], index: 1, kind: input, shape index: {}]
  %s2 = inlined_call_operand.vmem [shape: f32[16,32], index: 2, kind: input, shape index: {}]
  %s3 = inlined_call_operand.hbm [shape: bf16[2,16,32], index: 3, kind: output, shape index: {}]
  %s4 = sld [smem:[#allocation0]]
  $region45: #{tpu_custom_call.1} parent=0
    _
  %s6 = ssub.s32 1, %s4
  %s7 = scalar_select 0, %s6, %s4
  $region1: #{tpu_custom_call.1} parent=0
    #allocation2 [shape = 'u8[8192]{0}', space=vmem, size = 0x2000, scoped, tag = 'output window, operand 0']
    #allocation3 [shape = 's32[2]{0}', space=sflag, size = 0x8, scoped, tag = 'scoped memory for tpu_custom_call.1']
    %8 = vsyncpa [#allocation3], 0
    %s9 = scalar_lea.sflag [#allocation3], 1
    %10 = vsyncpa %s9, 0
    loop: start=0, step=1, limit=4
    $region2: #{tpu_custom_call.1} parent=1 // loop_pre_header
      _
    $region3: #{tpu_custom_call.1} parent=1 // loop_header
      %s12 = sphi 0, %s16
      %p13 = scmp.ge.s32.totalorder %s12, 4
      %s19 = sphi 0, %s31
      %s20 = sphi 0, %s27
      %s21 = sphi 0, %s19
      %s22 = sphi 0, %s20
      %s23 = sphi 0, %s21
      %s24 = sphi 0, %s22
      %s36 = sphi 0, %s38
      %s39 = sphi 0, %s36
      %s40 = sphi 0, %s39
      %s56 = sphi 0, %s40
      %s60 = sphi 0, %s60
      %s62 = sphi 0, %s60
      %s63 = sphi 0, %s62
      %s77 = sphi 0, %s63
      %s83 = sphi 0, %s85
      %s86 = sphi 0, %s83
      %s87 = sphi 0, %s86
      %s103 = sphi 0, %s87
      %s111 = sphi 0, %s113
      %s114 = sphi 0, %s111
      %s115 = sphi 0, %s114
      %s131 = sphi 0, %s115
    $region4: #{tpu_custom_call.1} parent=1 // loop_header_branch
      %15 = sbr.rel (%p13) target = $region8
    $region5: #{tpu_custom_call.1} parent=1 // loop_body
      %s17 = ssub.s32 %s12, 1
      %s18 = ssub.s32 %s12, 2
      %s25 = sadd.s32 1, %s20
      %p26 = scmp.ge.s32.totalorder %s25, 2
      %s27 = scalar_select %p26, 0, %s25
      %s28 = sadd.s32 1, %s19
      %s29 = scalar_select %p26, %s28, %s19
      %p30 = scmp.ge.s32.totalorder %s29, 1
      %s31 = scalar_select %p30, 0, %s29
      %s32 = ssub.s32 %s20, %s27
      %s33 = ssub.s32 %s19, %s31
      %s34 = sor.u32 %s32, %s33
      %p35 = scmp.eq.s32.totalorder %s34, 0
      %s37 = sadd.s32 %s36, 1
      %s38 = scalar_select %p35, %s36, %s37
      %p41 = pneg %p35
      %p42 = scmp.eq.s32.totalorder %s12, 1
      %p43 = por %p41, %p42
      %p44 = scmp.ne.s32.totalorder %s36, %s39
      %p45 = scmp.eq.s32.totalorder %s12, 0
      %p46 = por %p44, %p45
      %p47 = scmp.ne.s32.totalorder %s36, %s39
      %p48 = scmp.eq.s32.totalorder %s17, 1
      %p49 = por %p47, %p48
      %p50 = scmp.ne.s32.totalorder %s39, %s40
      %p51 = scmp.eq.s32.totalorder %s17, 0
      %p52 = por %p50, %p51
      %p53 = scmp.ne.s32.totalorder %s39, %s40
      %p54 = scmp.eq.s32.totalorder %s18, 1
      %p55 = por %p53, %p54
      %p57 = scmp.ne.s32.totalorder %s40, %s56
      %p58 = scmp.eq.s32.totalorder %s18, 0
      %p59 = por %p57, %p58
      %s61 = sadd.s32 %s60, 1
      %p64 = scmp.eq.s32.totalorder %s12, 1
      %p65 = scmp.ne.s32.totalorder %s60, %s62
      %p66 = scmp.eq.s32.totalorder %s12, 0
      %p67 = por %p65, %p66
      %p68 = scmp.ne.s32.totalorder %s60, %s62
      %p69 = scmp.eq.s32.totalorder %s17, 1
      %p70 = por %p68, %p69
      %p71 = scmp.ne.s32.totalorder %s62, %s63
      %p72 = scmp.eq.s32.totalorder %s17, 0
      %p73 = por %p71, %p72
      %p74 = scmp.ne.s32.totalorder %s62, %s63
      %p75 = scmp.eq.s32.totalorder %s18, 1
      %p76 = por %p74, %p75
      %p78 = scmp.ne.s32.totalorder %s63, %s77
      %p79 = scmp.eq.s32.totalorder %s18, 0
      %p80 = por %p78, %p79
      %s81 = ssub.s32 %s19, %s31
      %p82 = scmp.eq.s32.totalorder %s81, 0
      %s84 = sadd.s32 %s83, 1
      %s85 = scalar_select %p82, %s83, %s84
      %p88 = pneg %p82
      %p89 = scmp.eq.s32.totalorder %s12, 1
      %p90 = por %p88, %p89
      %p91 = scmp.ne.s32.totalorder %s83, %s86
      %p92 = scmp.eq.s32.totalorder %s12, 0
      %p93 = por %p91, %p92
      %p94 = scmp.ne.s32.totalorder %s83, %s86
      %p95 = scmp.eq.s32.totalorder %s17, 1
      %p96 = por %p94, %p95
      %p97 = scmp.ne.s32.totalorder %s86, %s87
      %p98 = scmp.eq.s32.totalorder %s17, 0
      %p99 = por %p97, %p98
      %p100 = scmp.ne.s32.totalorder %s86, %s87
      %p101 = scmp.eq.s32.totalorder %s18, 1
      %p102 = por %p100, %p101
      %p104 = scmp.ne.s32.totalorder %s87, %s103
      %p105 = scmp.eq.s32.totalorder %s18, 0
      %p106 = por %p104, %p105
      %s107 = ssub.s32 %s20, %s27
      %s108 = ssub.s32 %s19, %s31
      %s109 = sor.u32 %s107, %s108
      %p110 = scmp.eq.s32.totalorder %s109, 0
      %s112 = sadd.s32 %s111, 1
      %s113 = scalar_select %p110, %s111, %s112
      %p116 = pneg %p110
      %p117 = scmp.eq.s32.totalorder %s12, 1
      %p118 = por %p116, %p117
      %p119 = scmp.ne.s32.totalorder %s111, %s114
      %p120 = scmp.eq.s32.totalorder %s12, 0
      %p121 = por %p119, %p120
      %p122 = scmp.ne.s32.totalorder %s111, %s114
      %p123 = scmp.eq.s32.totalorder %s17, 1
      %p124 = por %p122, %p123
      %p125 = scmp.ne.s32.totalorder %s114, %s115
      %p126 = scmp.eq.s32.totalorder %s17, 0
      %p127 = por %p125, %p126
      %p128 = scmp.ne.s32.totalorder %s114, %s115
      %p129 = scmp.eq.s32.totalorder %s18, 1
      %p130 = por %p128, %p129
      %p132 = scmp.ne.s32.totalorder %s115, %s131
      %p133 = scmp.eq.s32.totalorder %s18, 0
      %p134 = por %p132, %p133
      %p135 = scmp.le.s32.totalorder 1, %s12
      %p136 = scmp.lt.s32.totalorder %s12, 3
      %p137 = pnand %p135, %p136
      %p138 = pneg %p137
      // Predicated region
      $region9: #{tpu_custom_call.1} parent=5 // pred_check
        _
      $region10: #{tpu_custom_call.1} parent=5 // pred_check_branch
        %140 = sbr.rel (%p137) target = $region12
      $region11: #{tpu_custom_call.1} parent=5 // pred_region
        %s141 = ssub.s32 %s12, 1
        // Predicated region
        $region13: #{tpu_custom_call.1} parent=11 // pred_check
          %p142 = pneg %p73
        $region14: #{tpu_custom_call.1} parent=11 // pred_check_branch
          %144 = sbr.rel (%p142) target = $region16
        $region15: #{tpu_custom_call.1} parent=11 // pred_region
          _
        $region16: #{tpu_custom_call.1} parent=11 // pred_fallthru
          _
        // Predicated region
        $region17: #{tpu_custom_call.1} parent=11 // pred_check
          %p145 = pneg %p99
        $region18: #{tpu_custom_call.1} parent=11 // pred_check_branch
          %147 = sbr.rel (%p145) target = $region20
        $region19: #{tpu_custom_call.1} parent=11 // pred_region
          %s148 = smul.u32 2, %s21
          %p149 = scmp.lt.s32.totalorder %s148, 1
          %s150 = scalar_select %p149, %s148, 1
          %s151 = smul.addr %s150, 8
          %s152 = scalar_lea.vmem %s2, %s151
          %s153 = smul.u32 2, %s21
        $region20: #{tpu_custom_call.1} parent=11 // pred_fallthru
          _
      $region12: #{tpu_custom_call.1} parent=5 // pred_fallthru
        _
      %p154 = scmp.lt.s32.totalorder %s12, 2
      // Predicated region
      $region21: #{tpu_custom_call.1} parent=5 // pred_check
        %p155 = pneg %p154
      $region22: #{tpu_custom_call.1} parent=5 // pred_check_branch
        %157 = sbr.rel (%p155) target = $region24
      $region23: #{tpu_custom_call.1} parent=5 // pred_region
        // Predicated region
        $region25: #{tpu_custom_call.1} parent=23 // pred_check
          %p158 = pneg %p46
        $region26: #{tpu_custom_call.1} parent=23 // pred_check_branch
          %160 = sbr.rel (%p158) target = $region28
        $region27: #{tpu_custom_call.1} parent=23 // pred_region
          %s161 = smul.u32 2, %s19
          %p162 = scmp.lt.s32.totalorder %s20, 1
          %s163 = scalar_select %p162, %s20, 1
          %p164 = scmp.lt.s32.totalorder %s161, 1
          %s165 = scalar_select %p164, %s161, 1
          %s166 = smul.addr %s163, 2
          %s167 = sadd.s32 %s165, %s166
          %s168 = smul.addr %s167, 4
          %s169 = scalar_lea.vmem %s0, %s168
          %s170 = smul.u32 2, %s19
        $region28: #{tpu_custom_call.1} parent=23 // pred_fallthru
          _
      $region24: #{tpu_custom_call.1} parent=5 // pred_fallthru
        _
      %p171 = scmp.le.s32.totalorder 1, %s12
      %p172 = scmp.lt.s32.totalorder %s12, 3
      %p173 = pnand %p171, %p172
      %p174 = pneg %p173
      // Predicated region
      $region29: #{tpu_custom_call.1} parent=5 // pred_check
        _
      $region30: #{tpu_custom_call.1} parent=5 // pred_check_branch
        %176 = sbr.rel (%p173) target = $region32
      $region31: #{tpu_custom_call.1} parent=5 // pred_region
        %s177 = ssub.s32 %s12, 1
        %s178 = smul.u32 2, %s21
        %p179 = scmp.lt.s32.totalorder %s22, 1
        %s180 = scalar_select %p179, %s22, 1
        %p181 = scmp.lt.s32.totalorder %s178, 1
        %s182 = scalar_select %p181, %s178, 1
        %s183 = smul.addr %s180, 2
        %s184 = sadd.s32 %s182, %s183
        %s185 = smul.addr %s184, 4
        %s186 = scalar_lea.vmem %s0, %s185
        %p187 = pneg %p52
        %p188 = pneg %p49
        %p189 = pneg %p73
        %p190 = pneg %p70
        %s191 = smul.u32 2, %s21
        %p192 = scmp.lt.s32.totalorder %s191, 1
        %s193 = scalar_select %p192, %s191, 1
        %s194 = smul.addr %s193, 8
        %s195 = scalar_lea.vmem %s2, %s194
        %p196 = pneg %p99
        %p197 = pneg %p96
        %p198 = pneg %p127
        %p199 = pneg %p124
        %s200 = sand.u32 %s114, 1
        %s201 = scalar_lea.sflag [#allocation3], %s200
        %s202 = sand.u32 %s114, 1
        %s203 = smul.addr %s202, 8
        %s204 = scalar_lea.vmem [#allocation2], %s203
        %s205 = smul.u32 2, %s21
        %p206 = scmp.lt.s32.totalorder %s22, 1
        %s207 = scalar_select %p206, %s22, 1
        %p208 = scmp.lt.s32.totalorder %s205, 1
        %s209 = scalar_select %p208, %s205, 1
        %s210 = smul.addr %s207, 2
        %s211 = sadd.s32 %s209, %s210
        %s212 = smul.addr %s211, 4
        %s213 = scalar_lea.vmem %s0, %s212
        %s214 = smul.u32 2, %s21
        %s215 = smul.u32 2, %s21
        %p216 = scmp.lt.s32.totalorder %s215, 1
        %s217 = scalar_select %p216, %s215, 1
        %s218 = smul.addr %s217, 8
        %s219 = scalar_lea.vmem %s2, %s218
        %s220 = smul.u32 2, %s21
        %s221 = smul.u32 2, %s21
        %v223 = vld [vmem:[%s213] sm:$0xf]
        %v224 = vld [vmem:[%s213 + $0x4] sm:$0xf]
        %v225 = vld [vmem:[%s1] sm:$0xf]
        %v226 = vld [vmem:[%s1 + $0x4] sm:$0xf]
        %v227 = vld [vmem:[%s1 + $0x8] sm:$0xf]
        %v228 = vld [vmem:[%s1 + $0xc] sm:$0xf]
        %v229 = vld [vmem:[%s1 + $0x10] sm:$0xf]
        %v230 = vld [vmem:[%s1 + $0x14] sm:$0xf]
        %v231 = vld [vmem:[%s1 + $0x18] sm:$0xf]
        %v232 = vld [vmem:[%s1 + $0x1c] sm:$0xf]
        %v233 = vld [vmem:[%s1 + $0x20] sm:$0xf]
        %v234 = vld [vmem:[%s1 + $0x24] sm:$0xf]
        %v235 = vld [vmem:[%s1 + $0x28] sm:$0xf]
        %v236 = vld [vmem:[%s1 + $0x2c] sm:$0xf]
        %v237 = vld [vmem:[%s1 + $0x30] sm:$0xf]
        %v238 = vld [vmem:[%s1 + $0x34] sm:$0xf]
        %v239 = vld [vmem:[%s1 + $0x38] sm:$0xf]
        %v240 = vld [vmem:[%s1 + $0x3c] sm:$0xf]
        %v241 = vld [vmem:[%s219] sm:$0xff]
        %v242 = vld [vmem:[%s219 + $0x8] sm:$0xff]
        %v245 = vunpack.c.l.b16 %v223
        %v246 = vunpack.c.l.b16 %v224
        %v247 = vpack.c.b16 %v246, %v245
        %v265 = vunpack.c.l.b16 %v225
        %v266 = vunpack.c.l.b16 %v226
        %v267 = vunpack.c.l.b16 %v227
        %v268 = vunpack.c.l.b16 %v228
        %v269 = vunpack.c.l.b16 %v229
        %v270 = vunpack.c.l.b16 %v230
        %v271 = vunpack.c.l.b16 %v231
        %v272 = vunpack.c.l.b16 %v232
        %v273 = vunpack.c.l.b16 %v233
        %v274 = vunpack.c.l.b16 %v234
        %v275 = vunpack.c.l.b16 %v235
        %v276 = vunpack.c.l.b16 %v236
        %v277 = vunpack.c.l.b16 %v237
        %v278 = vunpack.c.l.b16 %v238
        %v279 = vunpack.c.l.b16 %v239
        %v280 = vunpack.c.l.b16 %v240
        %v281 = vpack.c.b16 %v266, %v265
        %v282 = vpack.c.b16 %v268, %v267
        %v283 = vpack.c.b16 %v270, %v269
        %v284 = vpack.c.b16 %v272, %v271
        %v285 = vpack.c.b16 %v274, %v273
        %v286 = vpack.c.b16 %v276, %v275
        %v287 = vpack.c.b16 %v278, %v277
        %v288 = vpack.c.b16 %v280, %v279
        %297 = vmatprep.subr.bf16.mxu0 0
        %298 = vmatpush1.bf16.msra.mxu0 %v281
        %299 = vmatprep.subr.bf16.mxu0 0
        %300 = vmatpush1.bf16.msra.mxu0 %v282
        %301 = vmatprep.subr.bf16.mxu0 0
        %302 = vmatpush1.bf16.msra.mxu0 %v283
        %303 = vmatprep.subr.bf16.mxu0 0
        %304 = vmatpush1.bf16.msra.mxu0 %v284
        %305 = vmatprep.subr.bf16.mxu0 0
        %306 = vmatpush1.bf16.msra.mxu0 %v285
        %307 = vmatprep.subr.bf16.mxu0 0
        %308 = vmatpush1.bf16.msra.mxu0 %v286
        %309 = vmatprep.subr.bf16.mxu0 0
        %310 = vmatpush1.bf16.msra.mxu0 %v287
        %311 = vmatprep.subr.bf16.mxu0 0
        %312 = vmatpush1.bf16.msra.mxu0 %v288
        %313 = vmatprep.subr.bf16.mxu0 0
        %314 = vmatpush1.bf16.msra.mxu0 0
        %315 = vmatprep.subr.bf16.mxu0 0
        %316 = vmatpush1.bf16.msra.mxu0 0
        %317 = vmatprep.subr.bf16.mxu0 0
        %318 = vmatpush1.bf16.msra.mxu0 0
        %319 = vmatprep.subr.bf16.mxu0 0
        %320 = vmatpush1.bf16.msra.mxu0 0
        %321 = vmatprep.subr.bf16.mxu0 0
        %322 = vmatpush1.bf16.msra.mxu0 0
        %323 = vmatprep.subr.bf16.mxu0 0
        %324 = vmatpush1.bf16.msra.mxu0 0
        %325 = vmatprep.subr.bf16.mxu0 0
        %326 = vmatpush1.bf16.msra.mxu0 0
        %327 = vmatprep.subr.bf16.mxu0 0
        %328 = vmatpush1.bf16.msra.mxu0 0
        %329 = vmatprep.mubr.bf16.mxu0 0
        %330 = vmatmul.mubr.bf16.gmra.mrb[0].mxu0 %v247
        %v331 = vpop.f32.mrb[0].mxu0
        %v332 = vadd.f32 %v241, %v331
        %v333 = vpop.f32.mrb[0].mxu0
        %v334 = vpop.f32.mrb[0].mxu0
        %v335 = vadd.f32 %v242, %v334
        %v336 = vpop.f32.mrb[0].mxu0
        %337 = vdwg.mxu0
        %v338 = vpack.c.bf16 %v335, %v332
        %v340 = vunpack.c.l.b16 %v338
        %v341 = vunpack.c.h.b16 %v338
        %v342 = vpack.c.b16 %v340, %v340
        %v343 = vpack.c.b16 %v341, %v341
        %vm346 = vcmask 257024
        %347 = vst.msk [vmem:[%s204] sm:$0xf] %vm346, %v342
        %348 = vst.msk [vmem:[%s204 + $0x4] sm:$0xf] %vm346, %v343
        %s349 = sand.u32 %s114, 1
        %s350 = scalar_lea.sflag [#allocation3], %s349
        %s351 = sand.u32 %s114, 1
        %s352 = smul.addr %s351, 8
        %s353 = scalar_lea.vmem [#allocation2], %s352
        // Predicated region
        $region33: #{tpu_custom_call.1} parent=31 // pred_check
          %p354 = pneg %p124
        $region34: #{tpu_custom_call.1} parent=31 // pred_check_branch
          %356 = sbr.rel (%p354) target = $region36
        $region35: #{tpu_custom_call.1} parent=31 // pred_region
          %s357 = smul.u32 2, %s21
          %s359 = ssub.s32 128, 128
          %360 = vsyncadd %s350, %s359
          %s361 = smul.addr %s22, 2
          %s362 = sadd.s32 %s357, %s361
          %s363 = smul.addr %s362, 64
          %s364 = scalar_lea.hbm %s3, %s363
          %s365 = sshll.u32 %s353, 4
          %s366 = int_to_ptr.vmem [resolvable:$true] %s365
          %371 = dma.vmem_to_hbm [thread:$0]  %s366, 128, %s364, %s350, 64, 64, 4
        $region36: #{tpu_custom_call.1} parent=31 // pred_fallthru
          _
      $region32: #{tpu_custom_call.1} parent=5 // pred_fallthru
        _
      %p372 = scmp.le.s32.totalorder 2, %s12
      // Predicated region
      $region37: #{tpu_custom_call.1} parent=5 // pred_check
        %p373 = pneg %p372
      $region38: #{tpu_custom_call.1} parent=5 // pred_check_branch
        %375 = sbr.rel (%p373) target = $region40
      $region39: #{tpu_custom_call.1} parent=5 // pred_region
        %s376 = ssub.s32 %s12, 2
        // Predicated region
        $region41: #{tpu_custom_call.1} parent=39 // pred_check
          %p377 = pneg %p130
        $region42: #{tpu_custom_call.1} parent=39 // pred_check_branch
          %379 = sbr.rel (%p377) target = $region44
        $region43: #{tpu_custom_call.1} parent=39 // pred_region
          %s380 = sand.u32 %s115, 1
          %s381 = scalar_lea.sflag [#allocation3], %s380
          %s382 = sand.u32 %s115, 1
          %s383 = smul.addr %s382, 8
          %s384 = scalar_lea.vmem [#allocation2], %s383
          %385 = dma.done %s381, 128
        $region44: #{tpu_custom_call.1} parent=39 // pred_fallthru
          _
      $region40: #{tpu_custom_call.1} parent=5 // pred_fallthru
        _
    $region6: #{tpu_custom_call.1} parent=1 // loop_footer
      %s16 = sadd.s32 1, %s12
    $region7: #{tpu_custom_call.1} parent=1 // loop_footer_branch
      %11 = sbr.rel target = $region3
    $region8: #{tpu_custom_call.1} parent=1 // loop_exit
      _
    %386 = vsyncpa [#allocation3], 1
    %s387 = scalar_lea.sflag [#allocation3], 1
    %388 = vsyncpa %s387, 1

</llo_original>
